<compile_context>
chip_gen: v7x
topology: tpu7x:2x2x1
jax: 0.10.0
libtpu: 0.0.40
codegen_flags: <defaults>
</compile_context>

<pallas_src>
import math

import jax
import jax.numpy as jnp
from jax.experimental import pallas as pl
from jax.experimental.pallas import tpu as pltpu


def _round_up(x, m):
    return ((x + m - 1) // m) * m


def _multilinear_kernel(x_ref, w_ref, b_ref, o_ref, acc_ref):
    # x_ref: (Bp, tk)  w_ref: (tk, tn)  b_ref: (1, tn)  o_ref: (Bp, tn)
    # acc_ref: (Bp, tn) f32 scratch, resident across the K grid axis.
    k = pl.program_id(2)

    @pl.when(k == 0)
    def _():
        acc_ref[...] = jnp.zeros_like(acc_ref)

    acc_ref[...] += jnp.dot(
        x_ref[...], w_ref[...], preferred_element_type=jnp.float32
    )

    @pl.when(k == pl.num_programs(2) - 1)
    def _():
        o_ref[...] = (acc_ref[...] + b_ref[...].astype(jnp.float32)).astype(
            o_ref.dtype
        )


def multilinear_forward(x, weight, bias, *, tn=256, tk=512, stream_dtype=None):
    """Parallel linear: out[t] = x @ weight[t] + bias[t] (MultiLinear.forward)."""
    num_tries, in_features, out_features = weight.shape
    batch = x.shape[0]
    out_dtype = x.dtype

    # Optionally stream operands in a narrower dtype (e.g. bf16). The MXU still
    # accumulates in f32 via preferred_element_type; weight streaming dominates
    # HBM traffic so this roughly halves wall clock at production sizes.
    if stream_dtype is not None:
        x = x.astype(stream_dtype)
        weight = weight.astype(stream_dtype)

    # (8,128)-aligned, lane-dense padded geometry.
    bp = _round_up(batch, 8)
    tn = min(tn, _round_up(out_features, 128))
    tk = min(tk, _round_up(in_features, 128))
    out_p = _round_up(out_features, tn)
    in_p = _round_up(in_features, tk)

    if (bp, in_p) != (batch, in_features):
        x = jnp.pad(x, ((0, bp - batch), (0, in_p - in_features)))
    if (in_p, out_p) != (in_features, out_features):
        weight = jnp.pad(
            weight, ((0, 0), (0, in_p - in_features), (0, out_p - out_features))
        )
    if out_p != out_features:
        bias = jnp.pad(bias, ((0, 0), (0, 0), (0, out_p - out_features)))

    grid = (num_tries, out_p // tn, in_p // tk)

    # Explicit scoped-VMEM budget: double-buffered tiles + f32 accumulator,
    # clamped to <= 48 MiB so it also fits v7x (64 MiB physical VMEM).
    x_item = jnp.dtype(x.dtype).itemsize
    w_item = jnp.dtype(weight.dtype).itemsize
    b_item = jnp.dtype(bias.dtype).itemsize
    o_item = jnp.dtype(out_dtype).itemsize
    est = (
        2 * tk * tn * w_item      # weight tiles (double-buffered) -- dominant
        + 2 * bp * tk * x_item    # x tiles
        + 2 * bp * tn * o_item    # output tiles
        + 2 * tn * b_item         # bias tiles
        + bp * tn * 4             # f32 accumulator scratch
    )
    vmem_limit = int(min(max(2 * est, 32 << 20), 48 << 20))

    # TODO(synk): for tiny problems (this demo size) a plain XLA einsum is faster;
    # batching several tries per grid step would further amortize the ~0.35us/step
    # overhead, but is omitted to keep the tiled kernel simple.
    out = pl.pallas_call(
        _multilinear_kernel,
        out_shape=jax.ShapeDtypeStruct((num_tries, bp, out_p), out_dtype),
        grid_spec=pltpu.PrefetchScalarGridSpec(
            num_scalar_prefetch=0,
            grid=grid,
            in_specs=[
                pl.BlockSpec((bp, tk), lambda t, n, k: (0, k)),
                pl.BlockSpec((None, tk, tn), lambda t, n, k: (t, k, n)),
                pl.BlockSpec((None, 1, tn), lambda t, n, k: (t, 0, n)),
            ],
            out_specs=pl.BlockSpec((None, bp, tn), lambda t, n, k: (t, 0, n)),
            scratch_shapes=[pltpu.VMEM((bp, tn), jnp.float32)],
        ),
        compiler_params=pltpu.CompilerParams(
            dimension_semantics=("parallel", "parallel", "arbitrary"),
            vmem_limit_bytes=vmem_limit,
        ),
    )(x, weight, bias)

    if (bp, out_p) != (batch, out_features):
        out = out[:, :batch, :out_features]
    return out


def init_kaiming_params(key, num_tries, in_features, out_features, dtype=jnp.float32):
    """Kaiming-uniform init mirroring the PyTorch init_kaiming (fan_in=in_features)."""
    fan_in = in_features
    gain = math.sqrt(2.0)  # nn.init.calculate_gain('relu')
    std = gain / math.sqrt(fan_in)
    bound = math.sqrt(3.0) * std
    kw, kb = jax.random.split(key)
    weight = jax.random.uniform(
        kw, (num_tries, in_features, out_features), dtype, -bound, bound
    )
    bias = jax.random.uniform(kb, (num_tries, 1, out_features), dtype, -bound, bound)
    return weight, bias


if __name__ == "__main__":
    key = jax.random.PRNGKey(0)
    k_param, k_x = jax.random.split(key)

    num_tries = 4
    batch = 8
    in_features = 32
    out_features = 32

    weight, bias = init_kaiming_params(k_param, num_tries, in_features, out_features)
    x = jax.random.normal(k_x, (batch, in_features), jnp.float32)

    out = multilinear_forward(x, weight, bias)
    out = jax.block_until_ready(out)

    # Reference: same semantics as torch x.matmul(weight) + bias.
    ref = jnp.einsum("bi,tio->tbo", x, weight) + bias
    assert out.shape == (num_tries, batch, out_features)
    assert jnp.allclose(out, ref, atol=1e-5, rtol=1e-5)

    print("KERNEL_OK")
</pallas_src>

<mosaic_0001>
module attributes {stable_mosaic.version = 11 : i64} {
  func.func @_multilinear_kernel(%arg0: i32, %arg1: i32, %arg2: i32, %arg3: memref<8x128xf32, #tpu.memory_space<vmem>>, %arg4: memref<1x128x128xf32, #tpu.memory_space<vmem>>, %arg5: memref<1x1x128xf32, #tpu.memory_space<vmem>>, %arg6: memref<1x8x128xf32, #tpu.memory_space<vmem>>, %arg7: memref<8x128xf32, #tpu.memory_space<vmem>>) attributes {dimension_semantics = [#tpu.dimension_semantics<parallel>, #tpu.dimension_semantics<parallel>, #tpu.dimension_semantics<arbitrary>], iteration_bounds = array<i64: 4, 1, 1>, scalar_prefetch = 0 : i64, scratch_operands = 1 : i64, tpu.core_type = #tpu.core_type<tc>, window_params = [{transform_indices = @transform_0, window_bounds = array<i64: 8, 128>}, {transform_indices = @transform_1, window_bounds = array<i64: 1, 128, 128>}, {transform_indices = @transform_2, window_bounds = array<i64: 1, 1, 128>}, {transform_indices = @transform_3, window_bounds = array<i64: 1, 8, 128>}]} {
    %c0_i32 = arith.constant 0 : i32
    %0 = arith.cmpi eq, %arg2, %c0_i32 : i32
    %1 = arith.extui %0 : i1 to i32
    %c0_i32_0 = arith.constant 0 : i32
    %2 = arith.cmpi ne, %1, %c0_i32_0 : i32
    scf.if %2 {
      %cst_11 = arith.constant 0.000000e+00 : f32
      %13 = vector.broadcast %cst_11 : f32 to vector<8x128xf32>
      %c0_12 = arith.constant 0 : index
      %c0_13 = arith.constant 0 : index
      %14 = vector.load %arg7[%c0_12, %c0_13] : memref<8x128xf32, #tpu.memory_space<vmem>>, vector<8x128xf32>
      tpu.vector_store %arg7[%c0_12, %c0_13], %13 {strides = array<i32>} : memref<8x128xf32, #tpu.memory_space<vmem>>, vector<8x128xf32>,
    } else {
    }
    %c0 = arith.constant 0 : index
    %c0_1 = arith.constant 0 : index
    %3 = vector.load %arg7[%c0, %c0_1] : memref<8x128xf32, #tpu.memory_space<vmem>>, vector<8x128xf32>
    %c0_2 = arith.constant 0 : index
    %c0_3 = arith.constant 0 : index
    %4 = vector.load %arg3[%c0_2, %c0_3] : memref<8x128xf32, #tpu.memory_space<vmem>>, vector<8x128xf32>
    %c0_4 = arith.constant 0 : index
    %c0_5 = arith.constant 0 : index
    %c0_6 = arith.constant 0 : index
    %5 = vector.load %arg4[%c0_4, %c0_5, %c0_6] : memref<1x128x128xf32, #tpu.memory_space<vmem>>, vector<1x128x128xf32>
    %6 = vector.shape_cast %5 : vector<1x128x128xf32> to vector<128x128xf32>
    %cst = arith.constant dense<0.000000e+00> : vector<8x128xf32>
    %7 = tpu.matmul %4, %6, %cst {dimension_numbers = #tpu.dot_dimension_numbers<[1], [0], [0], [1], [0, 0, 1, 1], [], []>} : vector<8x128xf32>, vector<128x128xf32>, vector<8x128xf32> -> vector<8x128xf32>
    %8 = arith.addf %3, %7 : vector<8x128xf32>
    %c0_7 = arith.constant 0 : index
    %c0_8 = arith.constant 0 : index
    %9 = vector.load %arg7[%c0_7, %c0_8] : memref<8x128xf32, #tpu.memory_space<vmem>>, vector<8x128xf32>
    tpu.vector_store %arg7[%c0_7, %c0_8], %8 {strides = array<i32>} : memref<8x128xf32, #tpu.memory_space<vmem>>, vector<8x128xf32>,
    %c0_i32_9 = arith.constant 0 : i32
    %10 = arith.cmpi eq, %arg2, %c0_i32_9 : i32
    %11 = arith.extui %10 : i1 to i32
    %c0_i32_10 = arith.constant 0 : i32
    %12 = arith.cmpi ne, %11, %c0_i32_10 : i32
    scf.if %12 {
      %c0_11 = arith.constant 0 : index
      %c0_12 = arith.constant 0 : index
      %13 = vector.load %arg7[%c0_11, %c0_12] : memref<8x128xf32, #tpu.memory_space<vmem>>, vector<8x128xf32>
      %c0_13 = arith.constant 0 : index
      %c0_14 = arith.constant 0 : index
      %c0_15 = arith.constant 0 : index
      %14 = vector.load %arg5[%c0_13, %c0_14, %c0_15] : memref<1x1x128xf32, #tpu.memory_space<vmem>>, vector<1x1x128xf32>
      %15 = vector.shape_cast %14 : vector<1x1x128xf32> to vector<1x128xf32>
      %16 = vector.broadcast %15 : vector<1x128xf32> to vector<8x128xf32>
      %17 = arith.addf %13, %16 : vector<8x128xf32>
      %c0_16 = arith.constant 0 : index
      %c0_17 = arith.constant 0 : index
      %c0_18 = arith.constant 0 : index
      %18 = vector.load %arg6[%c0_16, %c0_17, %c0_18] : memref<1x8x128xf32, #tpu.memory_space<vmem>>, vector<1x8x128xf32>
      %19 = vector.shape_cast %18 : vector<1x8x128xf32> to vector<8x128xf32>
      %20 = vector.shape_cast %17 : vector<8x128xf32> to vector<1x8x128xf32>
      tpu.vector_store %arg6[%c0_16, %c0_17, %c0_18], %20 {strides = array<i32>} : memref<1x8x128xf32, #tpu.memory_space<vmem>>, vector<1x8x128xf32>,
    } else {
    }
    return
  }
  func.func @transform_0(%arg0: i32, %arg1: i32, %arg2: i32) -> (i32, i32) {
    %c0_i32 = arith.constant 0 : i32
    %c0_i32_0 = arith.constant 0 : i32
    return %c0_i32, %arg2 : i32, i32
  }
  func.func @transform_1(%arg0: i32, %arg1: i32, %arg2: i32) -> (i32, i32, i32) {
    %c0_i32 = arith.constant 0 : i32
    return %arg0, %arg2, %arg1 : i32, i32, i32
  }
  func.func @transform_2(%arg0: i32, %arg1: i32, %arg2: i32) -> (i32, i32, i32) {
    %c0_i32 = arith.constant 0 : i32
    %c0_i32_0 = arith.constant 0 : i32
    return %arg0, %c0_i32, %arg1 : i32, i32, i32
  }
  func.func @transform_3(%arg0: i32, %arg1: i32, %arg2: i32) -> (i32, i32, i32) {
    %c0_i32 = arith.constant 0 : i32
    %c0_i32_0 = arith.constant 0 : i32
    return %arg0, %c0_i32, %arg1 : i32, i32, i32
  }
}

</mosaic_0001>

<llo_original>
// kernel: tpu_custom_call.1
$region0: #{tpu_custom_call.1}
  #allocation0 [shape = 'u32[]', space=smem, size = 0x4, offset = 0x4, fixed_abs, tag = 'smem constant byte address 0x4 - core index']
  #allocation1 [shape = 'u32[144,128]{1,0:T(1,128)}', space=vmem, size = 0x12000, scoped, tag = 'internal scratch']
  #allocation2 [shape = 'f32[8,128]{1,0:T(8,128)}', space=vmem, size = 0x1000, scoped, tag = 'scratch operand']
  %s0 = inlined_call_operand.hbm [shape: f32[8,128], index: 0, kind: input, shape index: {}]
  %s1 = inlined_call_operand.hbm [shape: f32[4,128,128], index: 1, kind: input, shape index: {}]
  %s2 = inlined_call_operand.vmem [shape: f32[4,1,128], index: 2, kind: input, shape index: {}]
  %s3 = inlined_call_operand.hbm [shape: f32[4,8,128], index: 3, kind: output, shape index: {}]
  %s4 = sld [smem:[#allocation0]]
  $region61: #{tpu_custom_call.1} parent=0
    _
  %s6 = ssub.s32 1, %s4
  %s7 = scalar_select 0, %s6, %s4
  $region1: #{tpu_custom_call.1} parent=0
    #allocation3 [shape = 'u8[4096]{0}', space=vmem, size = 0x1000, scoped, tag = 'input window, operand 0, single buffered']
    #allocation4 [shape = 's32[2]{0}', space=sflag, size = 0x8, scoped, tag = 'scoped memory for tpu_custom_call.1']
    #allocation5 [shape = 's32[2]{0}', space=sflag, size = 0x8, scoped, tag = 'scoped memory for tpu_custom_call.1']
    #allocation6 [shape = 'u8[131072]{0}', space=vmem, size = 0x20000, scoped, tag = 'input window, operand 1']
    #allocation7 [shape = 's32[2]{0}', space=sflag, size = 0x8, scoped, tag = 'scoped memory for tpu_custom_call.1']
    #allocation8 [shape = 'u8[8192]{0}', space=vmem, size = 0x2000, scoped, tag = 'output window, operand 0']
    %8 = vsyncpa [#allocation4], 0
    %9 = vsyncpa [#allocation7], 0
    %s10 = scalar_lea.sflag [#allocation7], 1
    %11 = vsyncpa %s10, 0
    %12 = vsyncpa [#allocation5], 0
    %s13 = scalar_lea.sflag [#allocation5], 1
    %14 = vsyncpa %s13, 0
    loop: start=0, step=1, limit=6
    $region2: #{tpu_custom_call.1} parent=1 // loop_pre_header
      _
    $region3: #{tpu_custom_call.1} parent=1 // loop_header
      %s16 = sphi 0, %s20
      %p17 = scmp.ge.s32.totalorder %s16, 6
      %s23 = sphi 0, %s42
      %s24 = sphi 0, %s38
      %s25 = sphi 0, %s34
      %s26 = sphi 0, %s23
      %s27 = sphi 0, %s24
      %s28 = sphi 0, %s25
      %s29 = sphi 0, %s26
      %s30 = sphi 0, %s27
      %s31 = sphi 0, %s28
      %s45 = sphi 0, %s47
      %s48 = sphi 0, %s45
      %s49 = sphi 0, %s48
      %s65 = sphi 0, %s49
      %s75 = sphi 0, %s77
      %s78 = sphi 0, %s75
      %s79 = sphi 0, %s78
      %s95 = sphi 0, %s79
      %s103 = sphi 0, %s105
      %s106 = sphi 0, %s103
      %s107 = sphi 0, %s106
      %s123 = sphi 0, %s107
      %s131 = sphi 0, %s133
      %s134 = sphi 0, %s131
      %s135 = sphi 0, %s134
      %s151 = sphi 0, %s135
    $region4: #{tpu_custom_call.1} parent=1 // loop_header_branch
      %19 = sbr.rel (%p17) target = $region8
    $region5: #{tpu_custom_call.1} parent=1 // loop_body
      %s21 = ssub.s32 %s16, 1
      %s22 = ssub.s32 %s16, 2
      %s32 = sadd.s32 1, %s25
      %p33 = scmp.ge.s32.totalorder %s32, 1
      %s34 = scalar_select %p33, 0, %s32
      %s35 = sadd.s32 1, %s24
      %s36 = scalar_select %p33, %s35, %s24
      %p37 = scmp.ge.s32.totalorder %s36, 1
      %s38 = scalar_select %p37, 0, %s36
      %s39 = sadd.s32 1, %s23
      %s40 = scalar_select %p37, %s39, %s23
      %p41 = scmp.ge.s32.totalorder %s40, 4
      %s42 = scalar_select %p41, 0, %s40
      %s43 = ssub.s32 %s25, %s34
      %p44 = scmp.eq.s32.totalorder %s43, 0
      %s46 = sadd.s32 %s45, 1
      %s47 = scalar_select %p44, %s45, %s46
      %p50 = pneg %p44
      %p51 = scmp.eq.s32.totalorder %s16, 3
      %p52 = por %p50, %p51
      %p53 = scmp.ne.s32.totalorder %s45, %s48
      %p54 = scmp.eq.s32.totalorder %s16, 0
      %p55 = por %p53, %p54
      %p56 = scmp.ne.s32.totalorder %s45, %s48
      %p57 = scmp.eq.s32.totalorder %s21, 3
      %p58 = por %p56, %p57
      %p59 = scmp.ne.s32.totalorder %s48, %s49
      %p60 = scmp.eq.s32.totalorder %s21, 0
      %p61 = por %p59, %p60
      %p62 = scmp.ne.s32.totalorder %s48, %s49
      %p63 = scmp.eq.s32.totalorder %s22, 3
      %p64 = por %p62, %p63
      %p66 = scmp.ne.s32.totalorder %s49, %s65
      %p67 = scmp.eq.s32.totalorder %s22, 0
      %p68 = por %p66, %p67
      %s69 = ssub.s32 %s23, %s42
      %s70 = ssub.s32 %s25, %s34
      %s71 = sor.u32 %s69, %s70
      %s72 = ssub.s32 %s24, %s38
      %s73 = sor.u32 %s71, %s72
      %p74 = scmp.eq.s32.totalorder %s73, 0
      %s76 = sadd.s32 %s75, 1
      %s77 = scalar_select %p74, %s75, %s76
      %p80 = pneg %p74
      %p81 = scmp.eq.s32.totalorder %s16, 3
      %p82 = por %p80, %p81
      %p83 = scmp.ne.s32.totalorder %s75, %s78
      %p84 = scmp.eq.s32.totalorder %s16, 0
      %p85 = por %p83, %p84
      %p86 = scmp.ne.s32.totalorder %s75, %s78
      %p87 = scmp.eq.s32.totalorder %s21, 3
      %p88 = por %p86, %p87
      %p89 = scmp.ne.s32.totalorder %s78, %s79
      %p90 = scmp.eq.s32.totalorder %s21, 0
      %p91 = por %p89, %p90
      %p92 = scmp.ne.s32.totalorder %s78, %s79
      %p93 = scmp.eq.s32.totalorder %s22, 3
      %p94 = por %p92, %p93
      %p96 = scmp.ne.s32.totalorder %s79, %s95
      %p97 = scmp.eq.s32.totalorder %s22, 0
      %p98 = por %p96, %p97
      %s99 = ssub.s32 %s23, %s42
      %s100 = ssub.s32 %s24, %s38
      %s101 = sor.u32 %s99, %s100
      %p102 = scmp.eq.s32.totalorder %s101, 0
      %s104 = sadd.s32 %s103, 1
      %s105 = scalar_select %p102, %s103, %s104
      %p108 = pneg %p102
      %p109 = scmp.eq.s32.totalorder %s16, 3
      %p110 = por %p108, %p109
      %p111 = scmp.ne.s32.totalorder %s103, %s106
      %p112 = scmp.eq.s32.totalorder %s16, 0
      %p113 = por %p111, %p112
      %p114 = scmp.ne.s32.totalorder %s103, %s106
      %p115 = scmp.eq.s32.totalorder %s21, 3
      %p116 = por %p114, %p115
      %p117 = scmp.ne.s32.totalorder %s106, %s107
      %p118 = scmp.eq.s32.totalorder %s21, 0
      %p119 = por %p117, %p118
      %p120 = scmp.ne.s32.totalorder %s106, %s107
      %p121 = scmp.eq.s32.totalorder %s22, 3
      %p122 = por %p120, %p121
      %p124 = scmp.ne.s32.totalorder %s107, %s123
      %p125 = scmp.eq.s32.totalorder %s22, 0
      %p126 = por %p124, %p125
      %s127 = ssub.s32 %s23, %s42
      %s128 = ssub.s32 %s24, %s38
      %s129 = sor.u32 %s127, %s128
      %p130 = scmp.eq.s32.totalorder %s129, 0
      %s132 = sadd.s32 %s131, 1
      %s133 = scalar_select %p130, %s131, %s132
      %p136 = pneg %p130
      %p137 = scmp.eq.s32.totalorder %s16, 3
      %p138 = por %p136, %p137
      %p139 = scmp.ne.s32.totalorder %s131, %s134
      %p140 = scmp.eq.s32.totalorder %s16, 0
      %p141 = por %p139, %p140
      %p142 = scmp.ne.s32.totalorder %s131, %s134
      %p143 = scmp.eq.s32.totalorder %s21, 3
      %p144 = por %p142, %p143
      %p145 = scmp.ne.s32.totalorder %s134, %s135
      %p146 = scmp.eq.s32.totalorder %s21, 0
      %p147 = por %p145, %p146
      %p148 = scmp.ne.s32.totalorder %s134, %s135
      %p149 = scmp.eq.s32.totalorder %s22, 3
      %p150 = por %p148, %p149
      %p152 = scmp.ne.s32.totalorder %s135, %s151
      %p153 = scmp.eq.s32.totalorder %s22, 0
      %p154 = por %p152, %p153
      %p155 = scmp.le.s32.totalorder 1, %s16
      %p156 = scmp.lt.s32.totalorder %s16, 5
      %p157 = pnand %p155, %p156
      %p158 = pneg %p157
      // Predicated region
      $region9: #{tpu_custom_call.1} parent=5 // pred_check
        _
      $region10: #{tpu_custom_call.1} parent=5 // pred_check_branch
        %160 = sbr.rel (%p157) target = $region12
      $region11: #{tpu_custom_call.1} parent=5 // pred_region
        %s161 = ssub.s32 %s16, 1
        // Predicated region
        $region13: #{tpu_custom_call.1} parent=11 // pred_check
          %p162 = pneg %p61
        $region14: #{tpu_custom_call.1} parent=11 // pred_check_branch
          %164 = sbr.rel (%p162) target = $region16
        $region15: #{tpu_custom_call.1} parent=11 // pred_region
          %s166 = ssub.s32 128, 128
          %167 = vsyncadd [#allocation4], %s166
          %s168 = smul.addr %s28, 128
          %s169 = scalar_lea.hbm %s0, %s168
          %s171 = sshll.u32 [#allocation3], 4
          %s172 = int_to_ptr.vmem [resolvable:$true] %s171
          %174 = dma.hbm_to_vmem [thread:$0]  %s169, 128, %s172, [#allocation4]
        $region16: #{tpu_custom_call.1} parent=11 // pred_fallthru
          _
      $region12: #{tpu_custom_call.1} parent=5 // pred_fallthru
        _
      %p175 = scmp.lt.s32.totalorder %s16, 4
      // Predicated region
      $region17: #{tpu_custom_call.1} parent=5 // pred_check
        %p176 = pneg %p175
      $region18: #{tpu_custom_call.1} parent=5 // pred_check_branch
        %178 = sbr.rel (%p176) target = $region20
      $region19: #{tpu_custom_call.1} parent=5 // pred_region
        // Predicated region
        $region21: #{tpu_custom_call.1} parent=19 // pred_check
          %p179 = pneg %p85
        $region22: #{tpu_custom_call.1} parent=19 // pred_check_branch
          %181 = sbr.rel (%p179) target = $region24
        $region23: #{tpu_custom_call.1} parent=19 // pred_region
          %s182 = sand.u32 %s75, 1
          %s183 = scalar_lea.sflag [#allocation7], %s182
          %s184 = sand.u32 %s75, 1
          %s185 = smul.addr %s184, 128
          %s186 = scalar_lea.vmem [#allocation6], %s185
          %s187 = smul.u32 16, %s25
          %s189 = ssub.s32 2048, 2048
          %190 = vsyncadd %s183, %s189
          %s191 = sadd.s32 %s24, %s187
          %s192 = smul.addr %s23, 16
          %s193 = sadd.s32 %s191, %s192
          %s194 = smul.addr %s193, 128
          %s195 = scalar_lea.hbm %s1, %s194
          %s196 = sshll.u32 %s186, 4
          %s197 = int_to_ptr.vmem [resolvable:$true] %s196
          %202 = dma.hbm_to_vmem [thread:$0]  %s195, 2048, %s197, %s183, 128, 128, 8
        $region24: #{tpu_custom_call.1} parent=19 // pred_fallthru
          _
        // Predicated region
        $region25: #{tpu_custom_call.1} parent=19 // pred_check
          %p203 = pneg %p113
        $region26: #{tpu_custom_call.1} parent=19 // pred_check_branch
          %205 = sbr.rel (%p203) target = $region28
        $region27: #{tpu_custom_call.1} parent=19 // pred_region
          %p206 = scmp.lt.s32.totalorder %s23, 3
          %s207 = scalar_select %p206, %s23, 3
          %p208 = scmp.lt.s32.totalorder %s24, 0
          %s209 = scalar_select %p208, %s24, 0
          %s210 = sadd.s32 %s209, %s207
          %s211 = scalar_lea.vmem %s2, %s210
        $region28: #{tpu_custom_call.1} parent=19 // pred_fallthru
          _
      $region20: #{tpu_custom_call.1} parent=5 // pred_fallthru
        _
      %p212 = scmp.le.s32.totalorder 1, %s16
      %p213 = scmp.lt.s32.totalorder %s16, 5
      %p214 = pnand %p212, %p213
      %p215 = pneg %p214
      // Predicated region
      $region29: #{tpu_custom_call.1} parent=5 // pred_check
        _
      $region30: #{tpu_custom_call.1} parent=5 // pred_check_branch
        %217 = sbr.rel (%p214) target = $region32
      $region31: #{tpu_custom_call.1} parent=5 // pred_region
        %s218 = ssub.s32 %s16, 1
        // Predicated region
        $region33: #{tpu_custom_call.1} parent=31 // pred_check
          %p219 = pneg %p61
        $region34: #{tpu_custom_call.1} parent=31 // pred_check_branch
          %221 = sbr.rel (%p219) target = $region36
        $region35: #{tpu_custom_call.1} parent=31 // pred_region
          %222 = dma.done [#allocation4], 128
        $region36: #{tpu_custom_call.1} parent=31 // pred_fallthru
          _
        %s223 = sand.u32 %s78, 1
        %s224 = scalar_lea.sflag [#allocation7], %s223
        %s225 = sand.u32 %s78, 1
        %s226 = smul.addr %s225, 128
        %s227 = scalar_lea.vmem [#allocation6], %s226
        // Predicated region
        $region37: #{tpu_custom_call.1} parent=31 // pred_check
          %p228 = pneg %p91
        $region38: #{tpu_custom_call.1} parent=31 // pred_check_branch
          %230 = sbr.rel (%p228) target = $region40
        $region39: #{tpu_custom_call.1} parent=31 // pred_region
          %231 = dma.done %s224, 2048
        $region40: #{tpu_custom_call.1} parent=31 // pred_fallthru
          _
        %p232 = pneg %p61
        %p233 = pneg %p58
        %s234 = sand.u32 %s78, 1
        %s235 = scalar_lea.sflag [#allocation7], %s234
        %s236 = sand.u32 %s78, 1
        %s237 = smul.addr %s236, 128
        %s238 = scalar_lea.vmem [#allocation6], %s237
        %p239 = pneg %p91
        %p240 = pneg %p88
        %p241 = scmp.lt.s32.totalorder %s26, 3
        %s242 = scalar_select %p241, %s26, 3
        %p243 = scmp.lt.s32.totalorder %s27, 0
        %s244 = scalar_select %p243, %s27, 0
        %s245 = sadd.s32 %s244, %s242
        %s246 = scalar_lea.vmem %s2, %s245
        %p247 = pneg %p119
        %p248 = pneg %p116
        %p249 = pneg %p147
        %p250 = pneg %p144
        %s251 = sand.u32 %s134, 1
        %s252 = scalar_lea.sflag [#allocation5], %s251
        %s253 = sand.u32 %s134, 1
        %s254 = smul.addr %s253, 8
        %s255 = scalar_lea.vmem [#allocation8], %s254
        %s256 = smul.u32 16, %s28
        %p257 = scmp.lt.s32.totalorder %s26, 3
        %s258 = scalar_select %p257, %s26, 3
        %p259 = scmp.lt.s32.totalorder %s27, 0
        %s260 = scalar_select %p259, %s27, 0
        %s261 = sadd.s32 %s260, %s258
        %s262 = scalar_lea.vmem %s2, %s261
        %p263 = scmp.eq.s32.totalorder %s28, 0
        // Predicated region
        $region41: #{tpu_custom_call.1} parent=31 // pred_check
          %p264 = pneg %p263
        $region42: #{tpu_custom_call.1} parent=31 // pred_check_branch
          %266 = sbr.rel (%p264) target = $region44
        $region43: #{tpu_custom_call.1} parent=31 // pred_region
          %267 = vst [vmem:[#allocation2] sm:$0xff] 0.0
        $region44: #{tpu_custom_call.1} parent=31 // pred_fallthru
          _
        %v268 = vld [vmem:[#allocation2] sm:$0xff]
        %v269 = vld [vmem:[#allocation3] sm:$0xff]
        %v270 = vld [vmem:[%s227] sm:$0xff]
        %v271 = vld [vmem:[%s227 + $0x8] sm:$0xff]
        %v272 = vld [vmem:[%s227 + $0x10] sm:$0xff]
        %v273 = vld [vmem:[%s227 + $0x18] sm:$0xff]
        %v274 = vld [vmem:[%s227 + $0x20] sm:$0xff]
        %v275 = vld [vmem:[%s227 + $0x28] sm:$0xff]
        %v276 = vld [vmem:[%s227 + $0x30] sm:$0xff]
        %v277 = vld [vmem:[%s227 + $0x38] sm:$0xff]
        %v278 = vld [vmem:[%s227 + $0x40] sm:$0xff]
        %v279 = vld [vmem:[%s227 + $0x48] sm:$0xff]
        %v280 = vld [vmem:[%s227 + $0x50] sm:$0xff]
        %v281 = vld [vmem:[%s227 + $0x58] sm:$0xff]
        %v282 = vld [vmem:[%s227 + $0x60] sm:$0xff]
        %v283 = vld [vmem:[%s227 + $0x68] sm:$0xff]
        %v284 = vld [vmem:[%s227 + $0x70] sm:$0xff]
        %v285 = vld [vmem:[%s227 + $0x78] sm:$0xff]
        %286 = vmatprep.subr.mxu0 0.0
        %287 = vmatpush1.msra.mxu0 %v270
        %288 = vmatprep.subr.mxu0 0.0
        %289 = vmatpush1.msra.mxu0 %v271
        %290 = vmatprep.subr.mxu0 0.0
        %291 = vmatpush1.msra.mxu0 %v272
        %292 = vmatprep.subr.mxu0 0.0
        %293 = vmatpush1.msra.mxu0 %v273
        %294 = vmatprep.subr.mxu0 0.0
        %295 = vmatpush1.msra.mxu0 %v274
        %296 = vmatprep.subr.mxu0 0.0
        %297 = vmatpush1.msra.mxu0 %v275
        %298 = vmatprep.subr.mxu0 0.0
        %299 = vmatpush1.msra.mxu0 %v276
        %300 = vmatprep.subr.mxu0 0.0
        %301 = vmatpush1.msra.mxu0 %v277
        %302 = vmatprep.subr.mxu0 0.0
        %303 = vmatpush1.msra.mxu0 %v278
        %304 = vmatprep.subr.mxu0 0.0
        %305 = vmatpush1.msra.mxu0 %v279
        %306 = vmatprep.subr.mxu0 0.0
        %307 = vmatpush1.msra.mxu0 %v280
        %308 = vmatprep.subr.mxu0 0.0
        %309 = vmatpush1.msra.mxu0 %v281
        %310 = vmatprep.subr.mxu0 0.0
        %311 = vmatpush1.msra.mxu0 %v282
        %312 = vmatprep.subr.mxu0 0.0
        %313 = vmatpush1.msra.mxu0 %v283
        %314 = vmatprep.subr.mxu0 0.0
        %315 = vmatpush1.msra.mxu0 %v284
        %316 = vmatprep.subr.mxu0 0.0
        %317 = vmatpush1.msra.mxu0 %v285
        %318 = vmatprep.subr.mxu0 0.0
        %319 = vmatpush1.msra.mxu0 0.0
        %320 = vmatprep.subr.mxu0 0.0
        %321 = vmatpush1.msra.mxu0 0.0
        %322 = vmatprep.subr.mxu0 0.0
        %323 = vmatpush1.msra.mxu0 0.0
        %324 = vmatprep.subr.mxu0 0.0
        %325 = vmatpush1.msra.mxu0 0.0
        %326 = vmatprep.subr.mxu0 0.0
        %327 = vmatpush1.msra.mxu0 0.0
        %328 = vmatprep.subr.mxu0 0.0
        %329 = vmatpush1.msra.mxu0 0.0
        %330 = vmatprep.subr.mxu0 0.0
        %331 = vmatpush1.msra.mxu0 0.0
        %332 = vmatprep.subr.mxu0 0.0
        %333 = vmatpush1.msra.mxu0 0.0
        %334 = vmatprep.subr.mxu0 0.0
        %335 = vmatpush1.msra.mxu0 0.0
        %336 = vmatprep.subr.mxu0 0.0
        %337 = vmatpush1.msra.mxu0 0.0
        %338 = vmatprep.subr.mxu0 0.0
        %339 = vmatpush1.msra.mxu0 0.0
        %340 = vmatprep.subr.mxu0 0.0
        %341 = vmatpush1.msra.mxu0 0.0
        %342 = vmatprep.subr.mxu0 0.0
        %343 = vmatpush1.msra.mxu0 0.0
        %344 = vmatprep.subr.mxu0 0.0
        %345 = vmatpush1.msra.mxu0 0.0
        %346 = vmatprep.subr.mxu0 0.0
        %347 = vmatpush1.msra.mxu0 0.0
        %348 = vmatprep.subr.mxu0 0.0
        %349 = vmatpush1.msra.mxu0 0.0
        %350 = vmatprep.mubr.f32.mxu0 0.0
        %351 = vmatmul.mubr.f32.gmra.mrb[0].mxu0 %v269
        %v352 = vpop.f32.mrb[0].mxu0
        %v353 = vadd.f32 0.0, %v352
        %v354 = vpop.f32.mrb[0].mxu0
        %355 = vdwg.mxu0
        %v356 = vadd.f32 %v268, %v353
        %357 = vst [vmem:[#allocation2] sm:$0xff] %v356
        // Predicated region
        $region45: #{tpu_custom_call.1} parent=31 // pred_check
          %p358 = pneg %p263
        $region46: #{tpu_custom_call.1} parent=31 // pred_check_branch
          %360 = sbr.rel (%p358) target = $region48
        $region47: #{tpu_custom_call.1} parent=31 // pred_region
          %v361 = vld [vmem:[#allocation2] sm:$0xff]
          %v362 = vld [vmem:[%s262] sm:$0x1]
          %v364 = vlaneseq
          %v365 = vshrl.u32 %v364, 7
          %v366 = vsub.s32 0, %v365
          %v367 = vrot.slane %v362, %v366
          %v369 = vadd.f32 %v361, %v367
          %370 = vst [vmem:[%s255] sm:$0xff] %v369
        $region48: #{tpu_custom_call.1} parent=31 // pred_fallthru
          _
        %s371 = sand.u32 %s134, 1
        %s372 = scalar_lea.sflag [#allocation5], %s371
        %s373 = sand.u32 %s134, 1
        %s374 = smul.addr %s373, 8
        %s375 = scalar_lea.vmem [#allocation8], %s374
        // Predicated region
        $region49: #{tpu_custom_call.1} parent=31 // pred_check
          %p376 = pneg %p144
        $region50: #{tpu_custom_call.1} parent=31 // pred_check_branch
          %378 = sbr.rel (%p376) target = $region52
        $region51: #{tpu_custom_call.1} parent=31 // pred_region
          %s380 = ssub.s32 128, 128
          %381 = vsyncadd %s372, %s380
          %s382 = sadd.s32 %s27, %s26
          %s383 = smul.addr %s382, 128
          %s384 = scalar_lea.hbm %s3, %s383
          %s386 = sshll.u32 %s375, 4
          %s387 = int_to_ptr.vmem [resolvable:$true] %s386
          %389 = dma.vmem_to_hbm [thread:$0]  %s387, 128, %s384, %s372
        $region52: #{tpu_custom_call.1} parent=31 // pred_fallthru
          _
      $region32: #{tpu_custom_call.1} parent=5 // pred_fallthru
        _
      %p390 = scmp.le.s32.totalorder 2, %s16
      // Predicated region
      $region53: #{tpu_custom_call.1} parent=5 // pred_check
        %p391 = pneg %p390
      $region54: #{tpu_custom_call.1} parent=5 // pred_check_branch
        %393 = sbr.rel (%p391) target = $region56
      $region55: #{tpu_custom_call.1} parent=5 // pred_region
        %s394 = ssub.s32 %s16, 2
        // Predicated region
        $region57: #{tpu_custom_call.1} parent=55 // pred_check
          %p395 = pneg %p150
        $region58: #{tpu_custom_call.1} parent=55 // pred_check_branch
          %397 = sbr.rel (%p395) target = $region60
        $region59: #{tpu_custom_call.1} parent=55 // pred_region
          %s398 = sand.u32 %s135, 1
          %s399 = scalar_lea.sflag [#allocation5], %s398
          %s400 = sand.u32 %s135, 1
          %s401 = smul.addr %s400, 8
          %s402 = scalar_lea.vmem [#allocation8], %s401
          %403 = dma.done %s399, 128
        $region60: #{tpu_custom_call.1} parent=55 // pred_fallthru
          _
      $region56: #{tpu_custom_call.1} parent=5 // pred_fallthru
        _
    $region6: #{tpu_custom_call.1} parent=1 // loop_footer
      %s20 = sadd.s32 1, %s16
    $region7: #{tpu_custom_call.1} parent=1 // loop_footer_branch
      %15 = sbr.rel target = $region3
    $region8: #{tpu_custom_call.1} parent=1 // loop_exit
      _
    %404 = vsyncpa [#allocation4], 1
    %s405 = scalar_lea.sflag [#allocation4], 1
    %406 = vsyncpa %s405, 1
    %407 = vsyncpa [#allocation7], 1
    %s408 = scalar_lea.sflag [#allocation7], 1
    %409 = vsyncpa %s408, 1
    %410 = vsyncpa [#allocation5], 1
    %s411 = scalar_lea.sflag [#allocation5], 1
    %412 = vsyncpa %s411, 1

</llo_original>
